<compile_context>
chip_gen: v5e
topology: v5e:2x2
jax: 0.10.0
libtpu: 0.0.40
codegen_flags: <defaults>
</compile_context>

<pallas_src>
import jax
import jax.numpy as jnp
from jax.experimental import pallas as pl
from jax.experimental.pallas import tpu as pltpu  # noqa: F401  (TPU backend)

EPS = 1e-5


def bn_add_kernel(x_ref, res_ref, gb_ref, out_ref):
    # x_ref/res_ref/out_ref: (N, C, L)  -- C on sublanes, L on lanes
    # gb_ref:                (C, 2)     -- column 0 = gamma, column 1 = beta
    x = x_ref[...].astype(jnp.float32)

    n_elems = x.shape[0] * x.shape[2]
    inv_n = jnp.float32(1.0 / n_elems)

    # Single fused pass over batch (axis 0) + spatial (axis 2).
    # NOTE: E[x^2] - E[x]^2 in f32 is fine for these sizes; switch to the
    # two-pass (x - mean)^2 form if inputs ever arrive as bf16.
    s = jnp.sum(x, axis=(0, 2), keepdims=True)         # (1, C, 1)
    ss = jnp.sum(x * x, axis=(0, 2), keepdims=True)    # (1, C, 1)
    mean = s * inv_n
    var = ss * inv_n - mean * mean                     # biased variance (training BN)

    gb = gb_ref[...].astype(jnp.float32)               # (C, 2), one tiny load
    gamma = gb[:, 0:1][None]                           # (1, C, 1)
    beta = gb[:, 1:2][None]                            # (1, C, 1)

    # Fold affine into per-channel scale/bias (rsqrt -> EUP slot).
    scale = gamma * jax.lax.rsqrt(var + EPS)
    bias = beta - mean * scale

    # Residual loaded only in the final expression; keeps live ranges low.
    out_ref[...] = (
        res_ref[...].astype(jnp.float32) + x * scale + bias
    ).astype(out_ref.dtype)


def batchnorm_add(x96, x89, gamma, beta):
    """Fused BatchNorm2d (training-mode stats, affine) + residual add.

    x96, x89: NCHW arrays of identical shape.  Returns NCHW.
    """
    N, C, H, W = x96.shape
    L = H * W

    # Contiguous (free) reshape for any N: NCHW -> (N, C, H*W). No transposes.
    x3 = x96.reshape(N, C, L)
    r3 = x89.reshape(N, C, L)

    # Pack gamma/beta into one (C, 2) f32 array -> single parameter DMA.
    gb = jnp.stack(
        [gamma.astype(jnp.float32), beta.astype(jnp.float32)], axis=1
    )  # (C, 2)

    out3 = pl.pallas_call(
        bn_add_kernel,
        out_shape=jax.ShapeDtypeStruct((N, C, L), x96.dtype),
        in_specs=[
            pl.BlockSpec((N, C, L), lambda: (0, 0, 0)),
            pl.BlockSpec((N, C, L), lambda: (0, 0, 0)),
            pl.BlockSpec((C, 2), lambda: (0, 0)),
        ],
        out_specs=pl.BlockSpec((N, C, L), lambda: (0, 0, 0)),
        # Reuse the residual's buffer for the output (input 1 -> output 0).
        input_output_aliases={1: 0},
    )(x3, r3, gb)

    return out3.reshape(N, C, H, W)


if __name__ == "__main__":
    key = jax.random.PRNGKey(0)
    k1, k2, k3, k4 = jax.random.split(key, 4)

    N, C, H, W = 1, 160, 14, 14
    x96 = jax.random.normal(k1, (N, C, H, W), dtype=jnp.float32)
    x89 = jax.random.normal(k2, (N, C, H, W), dtype=jnp.float32)

    # Affine parameters (randomized to exercise the scale/bias fold; PyTorch
    # default init would be gamma=1, beta=0).
    gamma = 1.0 + 0.1 * jax.random.normal(k3, (C,), dtype=jnp.float32)
    beta = 0.1 * jax.random.normal(k4, (C,), dtype=jnp.float32)

    fused = jax.jit(batchnorm_add)
    out = fused(x96, x89, gamma, beta)
    jax.block_until_ready(out)

    # Pure-JAX reference (training-mode BatchNorm2d + residual add).
    mean = jnp.mean(x96, axis=(0, 2, 3), keepdims=True)
    var = jnp.mean((x96 - mean) ** 2, axis=(0, 2, 3), keepdims=True)
    ref = (
        x89
        + (x96 - mean) * jax.lax.rsqrt(var + EPS) * gamma.reshape(1, C, 1, 1)
        + beta.reshape(1, C, 1, 1)
    )

    assert out.shape == (N, C, H, W)
    assert jnp.max(jnp.abs(out - ref)) < 1e-4

    print("KERNEL_OK")
</pallas_src>

<mosaic_0001>
module attributes {stable_mosaic.version = 11 : i64} {
  func.func @bn_add_kernel(%arg0: memref<1x160x196xf32, #tpu.memory_space<vmem>>, %arg1: memref<1x160x196xf32, #tpu.memory_space<vmem>>, %arg2: memref<160x2xf32, #tpu.memory_space<vmem>>, %arg3: memref<1x160x196xf32, #tpu.memory_space<vmem>>) attributes {dimension_semantics = [], scalar_prefetch = 0 : i64, scratch_operands = 0 : i64, tpu.core_type = #tpu.core_type<tc>} {
    %c0 = arith.constant 0 : index
    %c0_0 = arith.constant 0 : index
    %c0_1 = arith.constant 0 : index
    %0 = vector.load %arg0[%c0, %c0_0, %c0_1] : memref<1x160x196xf32, #tpu.memory_space<vmem>>, vector<1x160x196xf32>
    %cst = arith.constant dense<0.000000e+00> : vector<160xf32>
    %1 = vector.multi_reduction <add>, %0, %cst [0, 2] : vector<1x160x196xf32> to vector<160xf32>
    %2 = vector.shape_cast %1 : vector<160xf32> to vector<1x160x1xf32>
    %3 = arith.mulf %0, %0 : vector<1x160x196xf32>
    %cst_2 = arith.constant dense<0.000000e+00> : vector<160xf32>
    %4 = vector.multi_reduction <add>, %3, %cst_2 [0, 2] : vector<1x160x196xf32> to vector<160xf32>
    %5 = vector.shape_cast %4 : vector<160xf32> to vector<1x160x1xf32>
    %cst_3 = arith.constant 0.00510204071 : f32
    %6 = vector.broadcast %cst_3 : f32 to vector<1x160x1xf32>
    %7 = arith.mulf %2, %6 : vector<1x160x1xf32>
    %cst_4 = arith.constant 0.00510204071 : f32
    %8 = vector.broadcast %cst_4 : f32 to vector<1x160x1xf32>
    %9 = arith.mulf %5, %8 : vector<1x160x1xf32>
    %10 = arith.mulf %7, %7 : vector<1x160x1xf32>
    %11 = arith.subf %9, %10 : vector<1x160x1xf32>
    %c0_5 = arith.constant 0 : index
    %c0_6 = arith.constant 0 : index
    %12 = vector.load %arg2[%c0_5, %c0_6] : memref<160x2xf32, #tpu.memory_space<vmem>>, vector<160x2xf32>
    %13 = vector.extract_strided_slice %12 {offsets = [0, 0], sizes = [160, 1], strides = [1, 1]} : vector<160x2xf32> to vector<160x1xf32>
    %14 = vector.shape_cast %13 : vector<160x1xf32> to vector<1x160x1xf32>
    %15 = vector.extract_strided_slice %12 {offsets = [0, 1], sizes = [160, 1], strides = [1, 1]} : vector<160x2xf32> to vector<160x1xf32>
    %16 = vector.shape_cast %15 : vector<160x1xf32> to vector<1x160x1xf32>
    %cst_7 = arith.constant 9.99999974E-6 : f32
    %17 = vector.broadcast %cst_7 : f32 to vector<1x160x1xf32>
    %18 = arith.addf %11, %17 : vector<1x160x1xf32>
    %19 = math.rsqrt %18 : vector<1x160x1xf32>
    %20 = arith.mulf %14, %19 : vector<1x160x1xf32>
    %21 = arith.mulf %7, %20 : vector<1x160x1xf32>
    %22 = arith.subf %16, %21 : vector<1x160x1xf32>
    %c0_8 = arith.constant 0 : index
    %c0_9 = arith.constant 0 : index
    %c0_10 = arith.constant 0 : index
    %23 = vector.load %arg1[%c0_8, %c0_9, %c0_10] : memref<1x160x196xf32, #tpu.memory_space<vmem>>, vector<1x160x196xf32>
    %24 = vector.broadcast %20 : vector<1x160x1xf32> to vector<1x160x196xf32>
    %25 = arith.mulf %0, %24 : vector<1x160x196xf32>
    %26 = arith.addf %23, %25 : vector<1x160x196xf32>
    %27 = vector.broadcast %22 : vector<1x160x1xf32> to vector<1x160x196xf32>
    %28 = arith.addf %26, %27 : vector<1x160x196xf32>
    %c0_11 = arith.constant 0 : index
    %c0_12 = arith.constant 0 : index
    %c0_13 = arith.constant 0 : index
    %29 = vector.load %arg3[%c0_11, %c0_12, %c0_13] : memref<1x160x196xf32, #tpu.memory_space<vmem>>, vector<1x160x196xf32>
    tpu.vector_store %arg3[%c0_11, %c0_12, %c0_13], %28 {strides = array<i32>} : memref<1x160x196xf32, #tpu.memory_space<vmem>>, vector<1x160x196xf32>,
    return
  }
}

</mosaic_0001>

<llo_original>
// kernel: batchnorm_add.1
$region0: #{batchnorm_add.1}
  #allocation0 [shape = 'u32[]', space=smem, size = 0x4, offset = 0x4, fixed_abs, tag = 'smem constant byte address 0x4 - core index']
  #allocation1 [shape = 'u32[72,128]{1,0:T(1,128)}', space=vmem, size = 0x9000, scoped, tag = 'internal scratch']
  %s0 = inlined_call_operand.vmem [shape: f32[1,160,196], index: 0, kind: input, shape index: {}]
  %s1 = inlined_call_operand.vmem [shape: f32[1,160,196], index: 1, kind: input, shape index: {}, may-alias: {1,3}]
  %s2 = inlined_call_operand.vmem [shape: f32[160,2], index: 2, kind: input, shape index: {}]
  %s3 = inlined_call_operand.vmem [shape: f32[1,160,196], index: 3, kind: output, shape index: {}, may-alias: {1,3}]
  %s4 = sld [smem:[#allocation0]]
  $region22: #{batchnorm_add.1} parent=0
    _
  %s6 = ssub.s32 1, %s4
  %s7 = scalar_select 0, %s6, %s4
  // Predicated region
  $region2: #{batchnorm_add.1} parent=0 // pred_check
    _
  $region3: #{batchnorm_add.1} parent=0 // pred_check_branch
    %9 = sbr.rel (0) target = $region5
  $region4: #{batchnorm_add.1} parent=0 // pred_region
    _
  $region5: #{batchnorm_add.1} parent=0 // pred_fallthru
    _
  // Predicated region
  $region6: #{batchnorm_add.1} parent=0 // pred_check
    _
  $region7: #{batchnorm_add.1} parent=0 // pred_check_branch
    %11 = sbr.rel (0) target = $region9
  $region8: #{batchnorm_add.1} parent=0 // pred_region
    _
  $region9: #{batchnorm_add.1} parent=0 // pred_fallthru
    _
  // Predicated region
  $region10: #{batchnorm_add.1} parent=0 // pred_check
    _
  $region11: #{batchnorm_add.1} parent=0 // pred_check_branch
    %13 = sbr.rel (0) target = $region13
  $region12: #{batchnorm_add.1} parent=0 // pred_region
    _
  $region13: #{batchnorm_add.1} parent=0 // pred_fallthru
    _
  %v14 = vld [vmem:[%s0] sm:$0xff]
  %v15 = vld [vmem:[%s0 + $0x8] sm:$0xff]
  %v16 = vld [vmem:[%s0 + $0x10] sm:$0xff]
  %v17 = vld [vmem:[%s0 + $0x18] sm:$0xff]
  %v18 = vld [vmem:[%s0 + $0x20] sm:$0xff]
  %v19 = vld [vmem:[%s0 + $0x28] sm:$0xff]
  %v20 = vld [vmem:[%s0 + $0x30] sm:$0xff]
  %v21 = vld [vmem:[%s0 + $0x38] sm:$0xff]
  %v22 = vld [vmem:[%s0 + $0x40] sm:$0xff]
  %v23 = vld [vmem:[%s0 + $0x48] sm:$0xff]
  %v24 = vld [vmem:[%s0 + $0x50] sm:$0xff]
  %v25 = vld [vmem:[%s0 + $0x58] sm:$0xff]
  %v26 = vld [vmem:[%s0 + $0x60] sm:$0xff]
  %v27 = vld [vmem:[%s0 + $0x68] sm:$0xff]
  %v28 = vld [vmem:[%s0 + $0x70] sm:$0xff]
  %v29 = vld [vmem:[%s0 + $0x78] sm:$0xff]
  %v30 = vld [vmem:[%s0 + $0x80] sm:$0xff]
  %v31 = vld [vmem:[%s0 + $0x88] sm:$0xff]
  %v32 = vld [vmem:[%s0 + $0x90] sm:$0xff]
  %v33 = vld [vmem:[%s0 + $0x98] sm:$0xff]
  %v34 = vld [vmem:[%s0 + $0xa0] sm:$0xff]
  %v35 = vld [vmem:[%s0 + $0xa8] sm:$0xff]
  %v36 = vld [vmem:[%s0 + $0xb0] sm:$0xff]
  %v37 = vld [vmem:[%s0 + $0xb8] sm:$0xff]
  %v38 = vld [vmem:[%s0 + $0xc0] sm:$0xff]
  %v39 = vld [vmem:[%s0 + $0xc8] sm:$0xff]
  %v40 = vld [vmem:[%s0 + $0xd0] sm:$0xff]
  %v41 = vld [vmem:[%s0 + $0xd8] sm:$0xff]
  %v42 = vld [vmem:[%s0 + $0xe0] sm:$0xff]
  %v43 = vld [vmem:[%s0 + $0xe8] sm:$0xff]
  %v44 = vld [vmem:[%s0 + $0xf0] sm:$0xff]
  %v45 = vld [vmem:[%s0 + $0xf8] sm:$0xff]
  %v46 = vld [vmem:[%s0 + $0x100] sm:$0xff]
  %v47 = vld [vmem:[%s0 + $0x108] sm:$0xff]
  %v48 = vld [vmem:[%s0 + $0x110] sm:$0xff]
  %v49 = vld [vmem:[%s0 + $0x118] sm:$0xff]
  %v50 = vld [vmem:[%s0 + $0x120] sm:$0xff]
  %v51 = vld [vmem:[%s0 + $0x128] sm:$0xff]
  %v52 = vld [vmem:[%s0 + $0x130] sm:$0xff]
  %v53 = vld [vmem:[%s0 + $0x138] sm:$0xff]
  %vm54 = vcmask 556032
  %v55 = vsel %vm54, %v15, 0.0
  %v56 = vadd.f32 %v14, %v55
  %57 = vadd.xlane.f32.xlu0 %v56
  %v58 = vpop.xlane.xlu0 %57
  %v59 = vsel %vm54, %v17, 0.0
  %v60 = vadd.f32 %v16, %v59
  %61 = vadd.xlane.f32.xlu0 %v60
  %v62 = vpop.xlane.xlu0 %61
  %v63 = vsel %vm54, %v19, 0.0
  %v64 = vadd.f32 %v18, %v63
  %65 = vadd.xlane.f32.xlu0 %v64
  %v66 = vpop.xlane.xlu0 %65
  %v67 = vsel %vm54, %v21, 0.0
  %v68 = vadd.f32 %v20, %v67
  %69 = vadd.xlane.f32.xlu0 %v68
  %v70 = vpop.xlane.xlu0 %69
  %v71 = vsel %vm54, %v23, 0.0
  %v72 = vadd.f32 %v22, %v71
  %73 = vadd.xlane.f32.xlu0 %v72
  %v74 = vpop.xlane.xlu0 %73
  %v75 = vsel %vm54, %v25, 0.0
  %v76 = vadd.f32 %v24, %v75
  %77 = vadd.xlane.f32.xlu0 %v76
  %v78 = vpop.xlane.xlu0 %77
  %v79 = vsel %vm54, %v27, 0.0
  %v80 = vadd.f32 %v26, %v79
  %81 = vadd.xlane.f32.xlu0 %v80
  %v82 = vpop.xlane.xlu0 %81
  %v83 = vsel %vm54, %v29, 0.0
  %v84 = vadd.f32 %v28, %v83
  %85 = vadd.xlane.f32.xlu0 %v84
  %v86 = vpop.xlane.xlu0 %85
  %v87 = vsel %vm54, %v31, 0.0
  %v88 = vadd.f32 %v30, %v87
  %89 = vadd.xlane.f32.xlu0 %v88
  %v90 = vpop.xlane.xlu0 %89
  %v91 = vsel %vm54, %v33, 0.0
  %v92 = vadd.f32 %v32, %v91
  %93 = vadd.xlane.f32.xlu0 %v92
  %v94 = vpop.xlane.xlu0 %93
  %v95 = vsel %vm54, %v35, 0.0
  %v96 = vadd.f32 %v34, %v95
  %97 = vadd.xlane.f32.xlu0 %v96
  %v98 = vpop.xlane.xlu0 %97
  %v99 = vsel %vm54, %v37, 0.0
  %v100 = vadd.f32 %v36, %v99
  %101 = vadd.xlane.f32.xlu0 %v100
  %v102 = vpop.xlane.xlu0 %101
  %v103 = vsel %vm54, %v39, 0.0
  %v104 = vadd.f32 %v38, %v103
  %105 = vadd.xlane.f32.xlu0 %v104
  %v106 = vpop.xlane.xlu0 %105
  %v107 = vsel %vm54, %v41, 0.0
  %v108 = vadd.f32 %v40, %v107
  %109 = vadd.xlane.f32.xlu0 %v108
  %v110 = vpop.xlane.xlu0 %109
  %v111 = vsel %vm54, %v43, 0.0
  %v112 = vadd.f32 %v42, %v111
  %113 = vadd.xlane.f32.xlu0 %v112
  %v114 = vpop.xlane.xlu0 %113
  %v115 = vsel %vm54, %v45, 0.0
  %v116 = vadd.f32 %v44, %v115
  %117 = vadd.xlane.f32.xlu0 %v116
  %v118 = vpop.xlane.xlu0 %117
  %v119 = vsel %vm54, %v47, 0.0
  %v120 = vadd.f32 %v46, %v119
  %121 = vadd.xlane.f32.xlu0 %v120
  %v122 = vpop.xlane.xlu0 %121
  %v123 = vsel %vm54, %v49, 0.0
  %v124 = vadd.f32 %v48, %v123
  %125 = vadd.xlane.f32.xlu0 %v124
  %v126 = vpop.xlane.xlu0 %125
  %v127 = vsel %vm54, %v51, 0.0
  %v128 = vadd.f32 %v50, %v127
  %129 = vadd.xlane.f32.xlu0 %v128
  %v130 = vpop.xlane.xlu0 %129
  %v131 = vsel %vm54, %v53, 0.0
  %v132 = vadd.f32 %v52, %v131
  %133 = vadd.xlane.f32.xlu0 %v132
  %v134 = vpop.xlane.xlu0 %133
  %v135 = vmul.f32 %v14, %v14
  %v136 = vmul.f32 %v15, %v15
  %v137 = vmul.f32 %v16, %v16
  %v138 = vmul.f32 %v17, %v17
  %v139 = vmul.f32 %v18, %v18
  %v140 = vmul.f32 %v19, %v19
  %v141 = vmul.f32 %v20, %v20
  %v142 = vmul.f32 %v21, %v21
  %v143 = vmul.f32 %v22, %v22
  %v144 = vmul.f32 %v23, %v23
  %v145 = vmul.f32 %v24, %v24
  %v146 = vmul.f32 %v25, %v25
  %v147 = vmul.f32 %v26, %v26
  %v148 = vmul.f32 %v27, %v27
  %v149 = vmul.f32 %v28, %v28
  %v150 = vmul.f32 %v29, %v29
  %v151 = vmul.f32 %v30, %v30
  %v152 = vmul.f32 %v31, %v31
  %v153 = vmul.f32 %v32, %v32
  %v154 = vmul.f32 %v33, %v33
  %v155 = vmul.f32 %v34, %v34
  %v156 = vmul.f32 %v35, %v35
  %v157 = vmul.f32 %v36, %v36
  %v158 = vmul.f32 %v37, %v37
  %v159 = vmul.f32 %v38, %v38
  %v160 = vmul.f32 %v39, %v39
  %v161 = vmul.f32 %v40, %v40
  %v162 = vmul.f32 %v41, %v41
  %v163 = vmul.f32 %v42, %v42
  %v164 = vmul.f32 %v43, %v43
  %v165 = vmul.f32 %v44, %v44
  %v166 = vmul.f32 %v45, %v45
  %v167 = vmul.f32 %v46, %v46
  %v168 = vmul.f32 %v47, %v47
  %v169 = vmul.f32 %v48, %v48
  %v170 = vmul.f32 %v49, %v49
  %v171 = vmul.f32 %v50, %v50
  %v172 = vmul.f32 %v51, %v51
  %v173 = vmul.f32 %v52, %v52
  %v174 = vmul.f32 %v53, %v53
  %v175 = vsel %vm54, %v136, 0.0
  %v176 = vadd.f32 %v135, %v175
  %177 = vadd.xlane.f32.xlu0 %v176
  %v178 = vpop.xlane.xlu0 %177
  %v179 = vsel %vm54, %v138, 0.0
  %v180 = vadd.f32 %v137, %v179
  %181 = vadd.xlane.f32.xlu0 %v180
  %v182 = vpop.xlane.xlu0 %181
  %v183 = vsel %vm54, %v140, 0.0
  %v184 = vadd.f32 %v139, %v183
  %185 = vadd.xlane.f32.xlu0 %v184
  %v186 = vpop.xlane.xlu0 %185
  %v187 = vsel %vm54, %v142, 0.0
  %v188 = vadd.f32 %v141, %v187
  %189 = vadd.xlane.f32.xlu0 %v188
  %v190 = vpop.xlane.xlu0 %189
  %v191 = vsel %vm54, %v144, 0.0
  %v192 = vadd.f32 %v143, %v191
  %193 = vadd.xlane.f32.xlu0 %v192
  %v194 = vpop.xlane.xlu0 %193
  %v195 = vsel %vm54, %v146, 0.0
  %v196 = vadd.f32 %v145, %v195
  %197 = vadd.xlane.f32.xlu0 %v196
  %v198 = vpop.xlane.xlu0 %197
  %v199 = vsel %vm54, %v148, 0.0
  %v200 = vadd.f32 %v147, %v199
  %201 = vadd.xlane.f32.xlu0 %v200
  %v202 = vpop.xlane.xlu0 %201
  %v203 = vsel %vm54, %v150, 0.0
  %v204 = vadd.f32 %v149, %v203
  %205 = vadd.xlane.f32.xlu0 %v204
  %v206 = vpop.xlane.xlu0 %205
  %v207 = vsel %vm54, %v152, 0.0
  %v208 = vadd.f32 %v151, %v207
  %209 = vadd.xlane.f32.xlu0 %v208
  %v210 = vpop.xlane.xlu0 %209
  %v211 = vsel %vm54, %v154, 0.0
  %v212 = vadd.f32 %v153, %v211
  %213 = vadd.xlane.f32.xlu0 %v212
  %v214 = vpop.xlane.xlu0 %213
  %v215 = vsel %vm54, %v156, 0.0
  %v216 = vadd.f32 %v155, %v215
  %217 = vadd.xlane.f32.xlu0 %v216
  %v218 = vpop.xlane.xlu0 %217
  %v219 = vsel %vm54, %v158, 0.0
  %v220 = vadd.f32 %v157, %v219
  %221 = vadd.xlane.f32.xlu0 %v220
  %v222 = vpop.xlane.xlu0 %221
  %v223 = vsel %vm54, %v160, 0.0
  %v224 = vadd.f32 %v159, %v223
  %225 = vadd.xlane.f32.xlu0 %v224
  %v226 = vpop.xlane.xlu0 %225
  %v227 = vsel %vm54, %v162, 0.0
  %v228 = vadd.f32 %v161, %v227
  %229 = vadd.xlane.f32.xlu0 %v228
  %v230 = vpop.xlane.xlu0 %229
  %v231 = vsel %vm54, %v164, 0.0
  %v232 = vadd.f32 %v163, %v231
  %233 = vadd.xlane.f32.xlu0 %v232
  %v234 = vpop.xlane.xlu0 %233
  %v235 = vsel %vm54, %v166, 0.0
  %v236 = vadd.f32 %v165, %v235
  %237 = vadd.xlane.f32.xlu0 %v236
  %v238 = vpop.xlane.xlu0 %237
  %v239 = vsel %vm54, %v168, 0.0
  %v240 = vadd.f32 %v167, %v239
  %241 = vadd.xlane.f32.xlu0 %v240
  %v242 = vpop.xlane.xlu0 %241
  %v243 = vsel %vm54, %v170, 0.0
  %v244 = vadd.f32 %v169, %v243
  %245 = vadd.xlane.f32.xlu0 %v244
  %v246 = vpop.xlane.xlu0 %245
  %v247 = vsel %vm54, %v172, 0.0
  %v248 = vadd.f32 %v171, %v247
  %249 = vadd.xlane.f32.xlu0 %v248
  %v250 = vpop.xlane.xlu0 %249
  %v251 = vsel %vm54, %v174, 0.0
  %v252 = vadd.f32 %v173, %v251
  %253 = vadd.xlane.f32.xlu0 %v252
  %v254 = vpop.xlane.xlu0 %253
  %v255 = vmul.f32 %v58, 0.0051020407
  %v256 = vmul.f32 %v62, 0.0051020407
  %v257 = vmul.f32 %v66, 0.0051020407
  %v258 = vmul.f32 %v70, 0.0051020407
  %v259 = vmul.f32 %v74, 0.0051020407
  %v260 = vmul.f32 %v78, 0.0051020407
  %v261 = vmul.f32 %v82, 0.0051020407
  %v262 = vmul.f32 %v86, 0.0051020407
  %v263 = vmul.f32 %v90, 0.0051020407
  %v264 = vmul.f32 %v94, 0.0051020407
  %v265 = vmul.f32 %v98, 0.0051020407
  %v266 = vmul.f32 %v102, 0.0051020407
  %v267 = vmul.f32 %v106, 0.0051020407
  %v268 = vmul.f32 %v110, 0.0051020407
  %v269 = vmul.f32 %v114, 0.0051020407
  %v270 = vmul.f32 %v118, 0.0051020407
  %v271 = vmul.f32 %v122, 0.0051020407
  %v272 = vmul.f32 %v126, 0.0051020407
  %v273 = vmul.f32 %v130, 0.0051020407
  %v274 = vmul.f32 %v134, 0.0051020407
  %v275 = vmul.f32 %v178, 0.0051020407
  %v276 = vmul.f32 %v182, 0.0051020407
  %v277 = vmul.f32 %v186, 0.0051020407
  %v278 = vmul.f32 %v190, 0.0051020407
  %v279 = vmul.f32 %v194, 0.0051020407
  %v280 = vmul.f32 %v198, 0.0051020407
  %v281 = vmul.f32 %v202, 0.0051020407
  %v282 = vmul.f32 %v206, 0.0051020407
  %v283 = vmul.f32 %v210, 0.0051020407
  %v284 = vmul.f32 %v214, 0.0051020407
  %v285 = vmul.f32 %v218, 0.0051020407
  %v286 = vmul.f32 %v222, 0.0051020407
  %v287 = vmul.f32 %v226, 0.0051020407
  %v288 = vmul.f32 %v230, 0.0051020407
  %v289 = vmul.f32 %v234, 0.0051020407
  %v290 = vmul.f32 %v238, 0.0051020407
  %v291 = vmul.f32 %v242, 0.0051020407
  %v292 = vmul.f32 %v246, 0.0051020407
  %v293 = vmul.f32 %v250, 0.0051020407
  %v294 = vmul.f32 %v254, 0.0051020407
  %v295 = vmul.f32 %v255, %v255
  %v296 = vmul.f32 %v256, %v256
  %v297 = vmul.f32 %v257, %v257
  %v298 = vmul.f32 %v258, %v258
  %v299 = vmul.f32 %v259, %v259
  %v300 = vmul.f32 %v260, %v260
  %v301 = vmul.f32 %v261, %v261
  %v302 = vmul.f32 %v262, %v262
  %v303 = vmul.f32 %v263, %v263
  %v304 = vmul.f32 %v264, %v264
  %v305 = vmul.f32 %v265, %v265
  %v306 = vmul.f32 %v266, %v266
  %v307 = vmul.f32 %v267, %v267
  %v308 = vmul.f32 %v268, %v268
  %v309 = vmul.f32 %v269, %v269
  %v310 = vmul.f32 %v270, %v270
  %v311 = vmul.f32 %v271, %v271
  %v312 = vmul.f32 %v272, %v272
  %v313 = vmul.f32 %v273, %v273
  %v314 = vmul.f32 %v274, %v274
  %v315 = vsub.f32 %v275, %v295
  %v316 = vsub.f32 %v276, %v296
  %v317 = vsub.f32 %v277, %v297
  %v318 = vsub.f32 %v278, %v298
  %v319 = vsub.f32 %v279, %v299
  %v320 = vsub.f32 %v280, %v300
  %v321 = vsub.f32 %v281, %v301
  %v322 = vsub.f32 %v282, %v302
  %v323 = vsub.f32 %v283, %v303
  %v324 = vsub.f32 %v284, %v304
  %v325 = vsub.f32 %v285, %v305
  %v326 = vsub.f32 %v286, %v306
  %v327 = vsub.f32 %v287, %v307
  %v328 = vsub.f32 %v288, %v308
  %v329 = vsub.f32 %v289, %v309
  %v330 = vsub.f32 %v290, %v310
  %v331 = vsub.f32 %v291, %v311
  %v332 = vsub.f32 %v292, %v312
  %v333 = vsub.f32 %v293, %v313
  %v334 = vsub.f32 %v294, %v314
  %v335 = vld [vmem:[%s2] sm:$0xff]
  %v336 = vld [vmem:[%s2 + $0x8] sm:$0xff]
  %v337 = vld [vmem:[%s2 + $0x10] sm:$0xff]
  %v338 = vld [vmem:[%s2 + $0x18] sm:$0xff]
  %v339 = vld [vmem:[%s2 + $0x20] sm:$0xff]
  %v340 = vld [vmem:[%s2 + $0x28] sm:$0xff]
  %v341 = vld [vmem:[%s2 + $0x30] sm:$0xff]
  %v342 = vld [vmem:[%s2 + $0x38] sm:$0xff]
  %v343 = vld [vmem:[%s2 + $0x40] sm:$0xff]
  %v344 = vld [vmem:[%s2 + $0x48] sm:$0xff]
  %v345 = vld [vmem:[%s2 + $0x50] sm:$0xff]
  %v346 = vld [vmem:[%s2 + $0x58] sm:$0xff]
  %v347 = vld [vmem:[%s2 + $0x60] sm:$0xff]
  %v348 = vld [vmem:[%s2 + $0x68] sm:$0xff]
  %v349 = vld [vmem:[%s2 + $0x70] sm:$0xff]
  %v350 = vld [vmem:[%s2 + $0x78] sm:$0xff]
  %v351 = vld [vmem:[%s2 + $0x80] sm:$0xff]
  %v352 = vld [vmem:[%s2 + $0x88] sm:$0xff]
  %v353 = vld [vmem:[%s2 + $0x90] sm:$0xff]
  %v354 = vld [vmem:[%s2 + $0x98] sm:$0xff]
  %v355 = vadd.f32 %v315, 1e-05
  %v356 = vadd.f32 %v316, 1e-05
  %v357 = vadd.f32 %v317, 1e-05
  %v358 = vadd.f32 %v318, 1e-05
  %v359 = vadd.f32 %v319, 1e-05
  %v360 = vadd.f32 %v320, 1e-05
  %v361 = vadd.f32 %v321, 1e-05
  %v362 = vadd.f32 %v322, 1e-05
  %v363 = vadd.f32 %v323, 1e-05
  %v364 = vadd.f32 %v324, 1e-05
  %v365 = vadd.f32 %v325, 1e-05
  %v366 = vadd.f32 %v326, 1e-05
  %v367 = vadd.f32 %v327, 1e-05
  %v368 = vadd.f32 %v328, 1e-05
  %v369 = vadd.f32 %v329, 1e-05
  %v370 = vadd.f32 %v330, 1e-05
  %v371 = vadd.f32 %v331, 1e-05
  %v372 = vadd.f32 %v332, 1e-05
  %v373 = vadd.f32 %v333, 1e-05
  %v374 = vadd.f32 %v334, 1e-05
  %v375 = vrsqrt.pop %v355
  %v376 = vmul.f32 %v375, %v355
  %v377 = vmul.f32 %v376, %v375
  %v378 = vmul.f32 0.5, %v377
  %v379 = vsub.f32 1.5, %v378
  %v380 = vmul.f32 %v375, %v379
  %vm381 = vweird.f32 %v355
  %vm382 = vweird.f32 %v375
  %vm383 = vmor %vm381, %vm382
  %v384 = vsel %vm383, %v375, %v380
  %v385 = vrsqrt.pop %v356
  %v386 = vmul.f32 %v385, %v356
  %v387 = vmul.f32 %v386, %v385
  %v388 = vmul.f32 0.5, %v387
  %v389 = vsub.f32 1.5, %v388
  %v390 = vmul.f32 %v385, %v389
  %vm391 = vweird.f32 %v356
  %vm392 = vweird.f32 %v385
  %vm393 = vmor %vm391, %vm392
  %v394 = vsel %vm393, %v385, %v390
  %v395 = vrsqrt.pop %v357
  %v396 = vmul.f32 %v395, %v357
  %v397 = vmul.f32 %v396, %v395
  %v398 = vmul.f32 0.5, %v397
  %v399 = vsub.f32 1.5, %v398
  %v400 = vmul.f32 %v395, %v399
  %vm401 = vweird.f32 %v357
  %vm402 = vweird.f32 %v395
  %vm403 = vmor %vm401, %vm402
  %v404 = vsel %vm403, %v395, %v400
  %v405 = vrsqrt.pop %v358
  %v406 = vmul.f32 %v405, %v358
  %v407 = vmul.f32 %v406, %v405
  %v408 = vmul.f32 0.5, %v407
  %v409 = vsub.f32 1.5, %v408
  %v410 = vmul.f32 %v405, %v409
  %vm411 = vweird.f32 %v358
  %vm412 = vweird.f32 %v405
  %vm413 = vmor %vm411, %vm412
  %v414 = vsel %vm413, %v405, %v410
  %v415 = vrsqrt.pop %v359
  %v416 = vmul.f32 %v415, %v359
  %v417 = vmul.f32 %v416, %v415
  %v418 = vmul.f32 0.5, %v417
  %v419 = vsub.f32 1.5, %v418
  %v420 = vmul.f32 %v415, %v419
  %vm421 = vweird.f32 %v359
  %vm422 = vweird.f32 %v415
  %vm423 = vmor %vm421, %vm422
  %v424 = vsel %vm423, %v415, %v420
  %v425 = vrsqrt.pop %v360
  %v426 = vmul.f32 %v425, %v360
  %v427 = vmul.f32 %v426, %v425
  %v428 = vmul.f32 0.5, %v427
  %v429 = vsub.f32 1.5, %v428
  %v430 = vmul.f32 %v425, %v429
  %vm431 = vweird.f32 %v360
  %vm432 = vweird.f32 %v425
  %vm433 = vmor %vm431, %vm432
  %v434 = vsel %vm433, %v425, %v430
  %v435 = vrsqrt.pop %v361
  %v436 = vmul.f32 %v435, %v361
  %v437 = vmul.f32 %v436, %v435
  %v438 = vmul.f32 0.5, %v437
  %v439 = vsub.f32 1.5, %v438
  %v440 = vmul.f32 %v435, %v439
  %vm441 = vweird.f32 %v361
  %vm442 = vweird.f32 %v435
  %vm443 = vmor %vm441, %vm442
  %v444 = vsel %vm443, %v435, %v440
  %v445 = vrsqrt.pop %v362
  %v446 = vmul.f32 %v445, %v362
  %v447 = vmul.f32 %v446, %v445
  %v448 = vmul.f32 0.5, %v447
  %v449 = vsub.f32 1.5, %v448
  %v450 = vmul.f32 %v445, %v449
  %vm451 = vweird.f32 %v362
  %vm452 = vweird.f32 %v445
  %vm453 = vmor %vm451, %vm452
  %v454 = vsel %vm453, %v445, %v450
  %v455 = vrsqrt.pop %v363
  %v456 = vmul.f32 %v455, %v363
  %v457 = vmul.f32 %v456, %v455
  %v458 = vmul.f32 0.5, %v457
  %v459 = vsub.f32 1.5, %v458
  %v460 = vmul.f32 %v455, %v459
  %vm461 = vweird.f32 %v363
  %vm462 = vweird.f32 %v455
  %vm463 = vmor %vm461, %vm462
  %v464 = vsel %vm463, %v455, %v460
  %v465 = vrsqrt.pop %v364
  %v466 = vmul.f32 %v465, %v364
  %v467 = vmul.f32 %v466, %v465
  %v468 = vmul.f32 0.5, %v467
  %v469 = vsub.f32 1.5, %v468
  %v470 = vmul.f32 %v465, %v469
  %vm471 = vweird.f32 %v364
  %vm472 = vweird.f32 %v465
  %vm473 = vmor %vm471, %vm472
  %v474 = vsel %vm473, %v465, %v470
  %v475 = vrsqrt.pop %v365
  %v476 = vmul.f32 %v475, %v365
  %v477 = vmul.f32 %v476, %v475
  %v478 = vmul.f32 0.5, %v477
  %v479 = vsub.f32 1.5, %v478
  %v480 = vmul.f32 %v475, %v479
  %vm481 = vweird.f32 %v365
  %vm482 = vweird.f32 %v475
  %vm483 = vmor %vm481, %vm482
  %v484 = vsel %vm483, %v475, %v480
  %v485 = vrsqrt.pop %v366
  %v486 = vmul.f32 %v485, %v366
  %v487 = vmul.f32 %v486, %v485
  %v488 = vmul.f32 0.5, %v487
  %v489 = vsub.f32 1.5, %v488
  %v490 = vmul.f32 %v485, %v489
  %vm491 = vweird.f32 %v366
  %vm492 = vweird.f32 %v485
  %vm493 = vmor %vm491, %vm492
  %v494 = vsel %vm493, %v485, %v490
  %v495 = vrsqrt.pop %v367
  %v496 = vmul.f32 %v495, %v367
  %v497 = vmul.f32 %v496, %v495
  %v498 = vmul.f32 0.5, %v497
  %v499 = vsub.f32 1.5, %v498
  %v500 = vmul.f32 %v495, %v499
  %vm501 = vweird.f32 %v367
  %vm502 = vweird.f32 %v495
  %vm503 = vmor %vm501, %vm502
  %v504 = vsel %vm503, %v495, %v500
  %v505 = vrsqrt.pop %v368
  %v506 = vmul.f32 %v505, %v368
  %v507 = vmul.f32 %v506, %v505
  %v508 = vmul.f32 0.5, %v507
  %v509 = vsub.f32 1.5, %v508
  %v510 = vmul.f32 %v505, %v509
  %vm511 = vweird.f32 %v368
  %vm512 = vweird.f32 %v505
  %vm513 = vmor %vm511, %vm512
  %v514 = vsel %vm513, %v505, %v510
  %v515 = vrsqrt.pop %v369
  %v516 = vmul.f32 %v515, %v369
  %v517 = vmul.f32 %v516, %v515
  %v518 = vmul.f32 0.5, %v517
  %v519 = vsub.f32 1.5, %v518
  %v520 = vmul.f32 %v515, %v519
  %vm521 = vweird.f32 %v369
  %vm522 = vweird.f32 %v515
  %vm523 = vmor %vm521, %vm522
  %v524 = vsel %vm523, %v515, %v520
  %v525 = vrsqrt.pop %v370
  %v526 = vmul.f32 %v525, %v370
  %v527 = vmul.f32 %v526, %v525
  %v528 = vmul.f32 0.5, %v527
  %v529 = vsub.f32 1.5, %v528
  %v530 = vmul.f32 %v525, %v529
  %vm531 = vweird.f32 %v370
  %vm532 = vweird.f32 %v525
  %vm533 = vmor %vm531, %vm532
  %v534 = vsel %vm533, %v525, %v530
  %v535 = vrsqrt.pop %v371
  %v536 = vmul.f32 %v535, %v371
  %v537 = vmul.f32 %v536, %v535
  %v538 = vmul.f32 0.5, %v537
  %v539 = vsub.f32 1.5, %v538
  %v540 = vmul.f32 %v535, %v539
  %vm541 = vweird.f32 %v371
  %vm542 = vweird.f32 %v535
  %vm543 = vmor %vm541, %vm542
  %v544 = vsel %vm543, %v535, %v540
  %v545 = vrsqrt.pop %v372
  %v546 = vmul.f32 %v545, %v372
  %v547 = vmul.f32 %v546, %v545
  %v548 = vmul.f32 0.5, %v547
  %v549 = vsub.f32 1.5, %v548
  %v550 = vmul.f32 %v545, %v549
  %vm551 = vweird.f32 %v372
  %vm552 = vweird.f32 %v545
  %vm553 = vmor %vm551, %vm552
  %v554 = vsel %vm553, %v545, %v550
  %v555 = vrsqrt.pop %v373
  %v556 = vmul.f32 %v555, %v373
  %v557 = vmul.f32 %v556, %v555
  %v558 = vmul.f32 0.5, %v557
  %v559 = vsub.f32 1.5, %v558
  %v560 = vmul.f32 %v555, %v559
  %vm561 = vweird.f32 %v373
  %vm562 = vweird.f32 %v555
  %vm563 = vmor %vm561, %vm562
  %v564 = vsel %vm563, %v555, %v560
  %v565 = vrsqrt.pop %v374
  %v566 = vmul.f32 %v565, %v374
  %v567 = vmul.f32 %v566, %v565
  %v568 = vmul.f32 0.5, %v567
  %v569 = vsub.f32 1.5, %v568
  %v570 = vmul.f32 %v565, %v569
  %vm571 = vweird.f32 %v374
  %vm572 = vweird.f32 %v565
  %vm573 = vmor %vm571, %vm572
  %v574 = vsel %vm573, %v565, %v570
  %v575 = vmul.f32 %v335, %v384
  %v576 = vmul.f32 %v336, %v394
  %v577 = vmul.f32 %v337, %v404
  %v578 = vmul.f32 %v338, %v414
  %v579 = vmul.f32 %v339, %v424
  %v580 = vmul.f32 %v340, %v434
  %v581 = vmul.f32 %v341, %v444
  %v582 = vmul.f32 %v342, %v454
  %v583 = vmul.f32 %v343, %v464
  %v584 = vmul.f32 %v344, %v474
  %v585 = vmul.f32 %v345, %v484
  %v586 = vmul.f32 %v346, %v494
  %v587 = vmul.f32 %v347, %v504
  %v588 = vmul.f32 %v348, %v514
  %v589 = vmul.f32 %v349, %v524
  %v590 = vmul.f32 %v350, %v534
  %v591 = vmul.f32 %v351, %v544
  %v592 = vmul.f32 %v352, %v554
  %v593 = vmul.f32 %v353, %v564
  %v594 = vmul.f32 %v354, %v574
  %v595 = vmul.f32 %v255, %v575
  %v596 = vmul.f32 %v256, %v576
  %v597 = vmul.f32 %v257, %v577
  %v598 = vmul.f32 %v258, %v578
  %v599 = vmul.f32 %v259, %v579
  %v600 = vmul.f32 %v260, %v580
  %v601 = vmul.f32 %v261, %v581
  %v602 = vmul.f32 %v262, %v582
  %v603 = vmul.f32 %v263, %v583
  %v604 = vmul.f32 %v264, %v584
  %v605 = vmul.f32 %v265, %v585
  %v606 = vmul.f32 %v266, %v586
  %v607 = vmul.f32 %v267, %v587
  %v608 = vmul.f32 %v268, %v588
  %v609 = vmul.f32 %v269, %v589
  %v610 = vmul.f32 %v270, %v590
  %v611 = vmul.f32 %v271, %v591
  %v612 = vmul.f32 %v272, %v592
  %v613 = vmul.f32 %v273, %v593
  %v614 = vmul.f32 %v274, %v594
  %635 = vrot.lane.b32.xlu0 %v595, 1
  %v636 = vpop.permute.xlu0 %635
  %637 = vrot.lane.b32.xlu0 %v596, 1
  %v638 = vpop.permute.xlu0 %637
  %639 = vrot.lane.b32.xlu0 %v597, 1
  %v640 = vpop.permute.xlu0 %639
  %641 = vrot.lane.b32.xlu0 %v598, 1
  %v642 = vpop.permute.xlu0 %641
  %643 = vrot.lane.b32.xlu0 %v599, 1
  %v644 = vpop.permute.xlu0 %643
  %645 = vrot.lane.b32.xlu0 %v600, 1
  %v646 = vpop.permute.xlu0 %645
  %647 = vrot.lane.b32.xlu0 %v601, 1
  %v648 = vpop.permute.xlu0 %647
  %649 = vrot.lane.b32.xlu0 %v602, 1
  %v650 = vpop.permute.xlu0 %649
  %651 = vrot.lane.b32.xlu0 %v603, 1
  %v652 = vpop.permute.xlu0 %651
  %653 = vrot.lane.b32.xlu0 %v604, 1
  %v654 = vpop.permute.xlu0 %653
  %655 = vrot.lane.b32.xlu0 %v605, 1
  %v656 = vpop.permute.xlu0 %655
  %657 = vrot.lane.b32.xlu0 %v606, 1
  %v658 = vpop.permute.xlu0 %657
  %659 = vrot.lane.b32.xlu0 %v607, 1
  %v660 = vpop.permute.xlu0 %659
  %661 = vrot.lane.b32.xlu0 %v608, 1
  %v662 = vpop.permute.xlu0 %661
  %663 = vrot.lane.b32.xlu0 %v609, 1
  %v664 = vpop.permute.xlu0 %663
  %665 = vrot.lane.b32.xlu0 %v610, 1
  %v666 = vpop.permute.xlu0 %665
  %667 = vrot.lane.b32.xlu0 %v611, 1
  %v668 = vpop.permute.xlu0 %667
  %669 = vrot.lane.b32.xlu0 %v612, 1
  %v670 = vpop.permute.xlu0 %669
  %671 = vrot.lane.b32.xlu0 %v613, 1
  %v672 = vpop.permute.xlu0 %671
  %673 = vrot.lane.b32.xlu0 %v614, 1
  %v674 = vpop.permute.xlu0 %673
  %v695 = vsub.f32 %v335, %v636
  %v696 = vsub.f32 %v336, %v638
  %v697 = vsub.f32 %v337, %v640
  %v698 = vsub.f32 %v338, %v642
  %v699 = vsub.f32 %v339, %v644
  %v700 = vsub.f32 %v340, %v646
  %v701 = vsub.f32 %v341, %v648
  %v702 = vsub.f32 %v342, %v650
  %v703 = vsub.f32 %v343, %v652
  %v704 = vsub.f32 %v344, %v654
  %v705 = vsub.f32 %v345, %v656
  %v706 = vsub.f32 %v346, %v658
  %v707 = vsub.f32 %v347, %v660
  %v708 = vsub.f32 %v348, %v662
  %v709 = vsub.f32 %v349, %v664
  %v710 = vsub.f32 %v350, %v666
  %v711 = vsub.f32 %v351, %v668
  %v712 = vsub.f32 %v352, %v670
  %v713 = vsub.f32 %v353, %v672
  %v714 = vsub.f32 %v354, %v674
  %v715 = vld [vmem:[%s1] sm:$0xff]
  %v716 = vld [vmem:[%s1 + $0x8] sm:$0xff]
  %v717 = vld [vmem:[%s1 + $0x10] sm:$0xff]
  %v718 = vld [vmem:[%s1 + $0x18] sm:$0xff]
  %v719 = vld [vmem:[%s1 + $0x20] sm:$0xff]
  %v720 = vld [vmem:[%s1 + $0x28] sm:$0xff]
  %v721 = vld [vmem:[%s1 + $0x30] sm:$0xff]
  %v722 = vld [vmem:[%s1 + $0x38] sm:$0xff]
  %v723 = vld [vmem:[%s1 + $0x40] sm:$0xff]
  %v724 = vld [vmem:[%s1 + $0x48] sm:$0xff]
  %v725 = vld [vmem:[%s1 + $0x50] sm:$0xff]
  %v726 = vld [vmem:[%s1 + $0x58] sm:$0xff]
  %v727 = vld [vmem:[%s1 + $0x60] sm:$0xff]
  %v728 = vld [vmem:[%s1 + $0x68] sm:$0xff]
  %v729 = vld [vmem:[%s1 + $0x70] sm:$0xff]
  %v730 = vld [vmem:[%s1 + $0x78] sm:$0xff]
  %v731 = vld [vmem:[%s1 + $0x80] sm:$0xff]
  %v732 = vld [vmem:[%s1 + $0x88] sm:$0xff]
  %v733 = vld [vmem:[%s1 + $0x90] sm:$0xff]
  %v734 = vld [vmem:[%s1 + $0x98] sm:$0xff]
  %v735 = vld [vmem:[%s1 + $0xa0] sm:$0xff]
  %v736 = vld [vmem:[%s1 + $0xa8] sm:$0xff]
  %v737 = vld [vmem:[%s1 + $0xb0] sm:$0xff]
  %v738 = vld [vmem:[%s1 + $0xb8] sm:$0xff]
  %v739 = vld [vmem:[%s1 + $0xc0] sm:$0xff]
  %v740 = vld [vmem:[%s1 + $0xc8] sm:$0xff]
  %v741 = vld [vmem:[%s1 + $0xd0] sm:$0xff]
  %v742 = vld [vmem:[%s1 + $0xd8] sm:$0xff]
  %v743 = vld [vmem:[%s1 + $0xe0] sm:$0xff]
  %v744 = vld [vmem:[%s1 + $0xe8] sm:$0xff]
  %v745 = vld [vmem:[%s1 + $0xf0] sm:$0xff]
  %v746 = vld [vmem:[%s1 + $0xf8] sm:$0xff]
  %v747 = vld [vmem:[%s1 + $0x100] sm:$0xff]
  %v748 = vld [vmem:[%s1 + $0x108] sm:$0xff]
  %v749 = vld [vmem:[%s1 + $0x110] sm:$0xff]
  %v750 = vld [vmem:[%s1 + $0x118] sm:$0xff]
  %v751 = vld [vmem:[%s1 + $0x120] sm:$0xff]
  %v752 = vld [vmem:[%s1 + $0x128] sm:$0xff]
  %v753 = vld [vmem:[%s1 + $0x130] sm:$0xff]
  %v754 = vld [vmem:[%s1 + $0x138] sm:$0xff]
  %756 = vset.pattern.permute.xlu0 0
  %757 = vperm.xlu0 %756, %v575
  %v758 = vpop.permute.xlu0 %757
  %761 = vset.pattern.permute.xlu0 0
  %762 = vperm.xlu0 %761, %v576
  %v763 = vpop.permute.xlu0 %762
  %766 = vset.pattern.permute.xlu0 0
  %767 = vperm.xlu0 %766, %v577
  %v768 = vpop.permute.xlu0 %767
  %771 = vset.pattern.permute.xlu0 0
  %772 = vperm.xlu0 %771, %v578
  %v773 = vpop.permute.xlu0 %772
  %776 = vset.pattern.permute.xlu0 0
  %777 = vperm.xlu0 %776, %v579
  %v778 = vpop.permute.xlu0 %777
  %781 = vset.pattern.permute.xlu0 0
  %782 = vperm.xlu0 %781, %v580
  %v783 = vpop.permute.xlu0 %782
  %786 = vset.pattern.permute.xlu0 0
  %787 = vperm.xlu0 %786, %v581
  %v788 = vpop.permute.xlu0 %787
  %791 = vset.pattern.permute.xlu0 0
  %792 = vperm.xlu0 %791, %v582
  %v793 = vpop.permute.xlu0 %792
  %796 = vset.pattern.permute.xlu0 0
  %797 = vperm.xlu0 %796, %v583
  %v798 = vpop.permute.xlu0 %797
  %801 = vset.pattern.permute.xlu0 0
  %802 = vperm.xlu0 %801, %v584
  %v803 = vpop.permute.xlu0 %802
  %806 = vset.pattern.permute.xlu0 0
  %807 = vperm.xlu0 %806, %v585
  %v808 = vpop.permute.xlu0 %807
  %811 = vset.pattern.permute.xlu0 0
  %812 = vperm.xlu0 %811, %v586
  %v813 = vpop.permute.xlu0 %812
  %816 = vset.pattern.permute.xlu0 0
  %817 = vperm.xlu0 %816, %v587
  %v818 = vpop.permute.xlu0 %817
  %821 = vset.pattern.permute.xlu0 0
  %822 = vperm.xlu0 %821, %v588
  %v823 = vpop.permute.xlu0 %822
  %826 = vset.pattern.permute.xlu0 0
  %827 = vperm.xlu0 %826, %v589
  %v828 = vpop.permute.xlu0 %827
  %831 = vset.pattern.permute.xlu0 0
  %832 = vperm.xlu0 %831, %v590
  %v833 = vpop.permute.xlu0 %832
  %836 = vset.pattern.permute.xlu0 0
  %837 = vperm.xlu0 %836, %v591
  %v838 = vpop.permute.xlu0 %837
  %841 = vset.pattern.permute.xlu0 0
  %842 = vperm.xlu0 %841, %v592
  %v843 = vpop.permute.xlu0 %842
  %846 = vset.pattern.permute.xlu0 0
  %847 = vperm.xlu0 %846, %v593
  %v848 = vpop.permute.xlu0 %847
  %851 = vset.pattern.permute.xlu0 0
  %852 = vperm.xlu0 %851, %v594
  %v853 = vpop.permute.xlu0 %852
  %v855 = vmul.f32 %v14, %v758
  %v856 = vmul.f32 %v15, %v758
  %v857 = vmul.f32 %v16, %v763
  %v858 = vmul.f32 %v17, %v763
  %v859 = vmul.f32 %v18, %v768
  %v860 = vmul.f32 %v19, %v768
  %v861 = vmul.f32 %v20, %v773
  %v862 = vmul.f32 %v21, %v773
  %v863 = vmul.f32 %v22, %v778
  %v864 = vmul.f32 %v23, %v778
  %v865 = vmul.f32 %v24, %v783
  %v866 = vmul.f32 %v25, %v783
  %v867 = vmul.f32 %v26, %v788
  %v868 = vmul.f32 %v27, %v788
  %v869 = vmul.f32 %v28, %v793
  %v870 = vmul.f32 %v29, %v793
  %v871 = vmul.f32 %v30, %v798
  %v872 = vmul.f32 %v31, %v798
  %v873 = vmul.f32 %v32, %v803
  %v874 = vmul.f32 %v33, %v803
  %v875 = vmul.f32 %v34, %v808
  %v876 = vmul.f32 %v35, %v808
  %v877 = vmul.f32 %v36, %v813
  %v878 = vmul.f32 %v37, %v813
  %v879 = vmul.f32 %v38, %v818
  %v880 = vmul.f32 %v39, %v818
  %v881 = vmul.f32 %v40, %v823
  %v882 = vmul.f32 %v41, %v823
  %v883 = vmul.f32 %v42, %v828
  %v884 = vmul.f32 %v43, %v828
  %v885 = vmul.f32 %v44, %v833
  %v886 = vmul.f32 %v45, %v833
  %v887 = vmul.f32 %v46, %v838
  %v888 = vmul.f32 %v47, %v838
  %v889 = vmul.f32 %v48, %v843
  %v890 = vmul.f32 %v49, %v843
  %v891 = vmul.f32 %v50, %v848
  %v892 = vmul.f32 %v51, %v848
  %v893 = vmul.f32 %v52, %v853
  %v894 = vmul.f32 %v53, %v853
  %v895 = vadd.f32 %v715, %v855
  %v896 = vadd.f32 %v716, %v856
  %v897 = vadd.f32 %v717, %v857
  %v898 = vadd.f32 %v718, %v858
  %v899 = vadd.f32 %v719, %v859
  %v900 = vadd.f32 %v720, %v860
  %v901 = vadd.f32 %v721, %v861
  %v902 = vadd.f32 %v722, %v862
  %v903 = vadd.f32 %v723, %v863
  %v904 = vadd.f32 %v724, %v864
  %v905 = vadd.f32 %v725, %v865
  %v906 = vadd.f32 %v726, %v866
  %v907 = vadd.f32 %v727, %v867
  %v908 = vadd.f32 %v728, %v868
  %v909 = vadd.f32 %v729, %v869
  %v910 = vadd.f32 %v730, %v870
  %v911 = vadd.f32 %v731, %v871
  %v912 = vadd.f32 %v732, %v872
  %v913 = vadd.f32 %v733, %v873
  %v914 = vadd.f32 %v734, %v874
  %v915 = vadd.f32 %v735, %v875
  %v916 = vadd.f32 %v736, %v876
  %v917 = vadd.f32 %v737, %v877
  %v918 = vadd.f32 %v738, %v878
  %v919 = vadd.f32 %v739, %v879
  %v920 = vadd.f32 %v740, %v880
  %v921 = vadd.f32 %v741, %v881
  %v922 = vadd.f32 %v742, %v882
  %v923 = vadd.f32 %v743, %v883
  %v924 = vadd.f32 %v744, %v884
  %v925 = vadd.f32 %v745, %v885
  %v926 = vadd.f32 %v746, %v886
  %v927 = vadd.f32 %v747, %v887
  %v928 = vadd.f32 %v748, %v888
  %v929 = vadd.f32 %v749, %v889
  %v930 = vadd.f32 %v750, %v890
  %v931 = vadd.f32 %v751, %v891
  %v932 = vadd.f32 %v752, %v892
  %v933 = vadd.f32 %v753, %v893
  %v934 = vadd.f32 %v754, %v894
  %936 = vset.pattern.permute.xlu0 1
  %937 = vperm.xlu0 %936, %v695
  %v938 = vpop.permute.xlu0 %937
  %941 = vset.pattern.permute.xlu0 1
  %942 = vperm.xlu0 %941, %v696
  %v943 = vpop.permute.xlu0 %942
  %946 = vset.pattern.permute.xlu0 1
  %947 = vperm.xlu0 %946, %v697
  %v948 = vpop.permute.xlu0 %947
  %951 = vset.pattern.permute.xlu0 1
  %952 = vperm.xlu0 %951, %v698
  %v953 = vpop.permute.xlu0 %952
  %956 = vset.pattern.permute.xlu0 1
  %957 = vperm.xlu0 %956, %v699
  %v958 = vpop.permute.xlu0 %957
  %961 = vset.pattern.permute.xlu0 1
  %962 = vperm.xlu0 %961, %v700
  %v963 = vpop.permute.xlu0 %962
  %966 = vset.pattern.permute.xlu0 1
  %967 = vperm.xlu0 %966, %v701
  %v968 = vpop.permute.xlu0 %967
  %971 = vset.pattern.permute.xlu0 1
  %972 = vperm.xlu0 %971, %v702
  %v973 = vpop.permute.xlu0 %972
  %976 = vset.pattern.permute.xlu0 1
  %977 = vperm.xlu0 %976, %v703
  %v978 = vpop.permute.xlu0 %977
  %981 = vset.pattern.permute.xlu0 1
  %982 = vperm.xlu0 %981, %v704
  %v983 = vpop.permute.xlu0 %982
  %986 = vset.pattern.permute.xlu0 1
  %987 = vperm.xlu0 %986, %v705
  %v988 = vpop.permute.xlu0 %987
  %991 = vset.pattern.permute.xlu0 1
  %992 = vperm.xlu0 %991, %v706
  %v993 = vpop.permute.xlu0 %992
  %996 = vset.pattern.permute.xlu0 1
  %997 = vperm.xlu0 %996, %v707
  %v998 = vpop.permute.xlu0 %997
  %1001 = vset.pattern.permute.xlu0 1
  %1002 = vperm.xlu0 %1001, %v708
  %v1003 = vpop.permute.xlu0 %1002
  %1006 = vset.pattern.permute.xlu0 1
  %1007 = vperm.xlu0 %1006, %v709
  %v1008 = vpop.permute.xlu0 %1007
  %1011 = vset.pattern.permute.xlu0 1
  %1012 = vperm.xlu0 %1011, %v710
  %v1013 = vpop.permute.xlu0 %1012
  %1016 = vset.pattern.permute.xlu0 1
  %1017 = vperm.xlu0 %1016, %v711
  %v1018 = vpop.permute.xlu0 %1017
  %1021 = vset.pattern.permute.xlu0 1
  %1022 = vperm.xlu0 %1021, %v712
  %v1023 = vpop.permute.xlu0 %1022
  %1026 = vset.pattern.permute.xlu0 1
  %1027 = vperm.xlu0 %1026, %v713
  %v1028 = vpop.permute.xlu0 %1027
  %1031 = vset.pattern.permute.xlu0 1
  %1032 = vperm.xlu0 %1031, %v714
  %v1033 = vpop.permute.xlu0 %1032
  %v1035 = vadd.f32 %v895, %v938
  %v1036 = vadd.f32 %v896, %v938
  %v1037 = vadd.f32 %v897, %v943
  %v1038 = vadd.f32 %v898, %v943
  %v1039 = vadd.f32 %v899, %v948
  %v1040 = vadd.f32 %v900, %v948
  %v1041 = vadd.f32 %v901, %v953
  %v1042 = vadd.f32 %v902, %v953
  %v1043 = vadd.f32 %v903, %v958
  %v1044 = vadd.f32 %v904, %v958
  %v1045 = vadd.f32 %v905, %v963
  %v1046 = vadd.f32 %v906, %v963
  %v1047 = vadd.f32 %v907, %v968
  %v1048 = vadd.f32 %v908, %v968
  %v1049 = vadd.f32 %v909, %v973
  %v1050 = vadd.f32 %v910, %v973
  %v1051 = vadd.f32 %v911, %v978
  %v1052 = vadd.f32 %v912, %v978
  %v1053 = vadd.f32 %v913, %v983
  %v1054 = vadd.f32 %v914, %v983
  %v1055 = vadd.f32 %v915, %v988
  %v1056 = vadd.f32 %v916, %v988
  %v1057 = vadd.f32 %v917, %v993
  %v1058 = vadd.f32 %v918, %v993
  %v1059 = vadd.f32 %v919, %v998
  %v1060 = vadd.f32 %v920, %v998
  %v1061 = vadd.f32 %v921, %v1003
  %v1062 = vadd.f32 %v922, %v1003
  %v1063 = vadd.f32 %v923, %v1008
  %v1064 = vadd.f32 %v924, %v1008
  %v1065 = vadd.f32 %v925, %v1013
  %v1066 = vadd.f32 %v926, %v1013
  %v1067 = vadd.f32 %v927, %v1018
  %v1068 = vadd.f32 %v928, %v1018
  %v1069 = vadd.f32 %v929, %v1023
  %v1070 = vadd.f32 %v930, %v1023
  %v1071 = vadd.f32 %v931, %v1028
  %v1072 = vadd.f32 %v932, %v1028
  %v1073 = vadd.f32 %v933, %v1033
  %v1074 = vadd.f32 %v934, %v1033
  %1075 = vst [vmem:[%s3] sm:$0xff] %v1035
  %1076 = vst.msk [vmem:[%s3 + $0x8] sm:$0xff] %vm54, %v1036
  %1077 = vst [vmem:[%s3 + $0x10] sm:$0xff] %v1037
  %1078 = vst.msk [vmem:[%s3 + $0x18] sm:$0xff] %vm54, %v1038
  %1079 = vst [vmem:[%s3 + $0x20] sm:$0xff] %v1039
  %1080 = vst.msk [vmem:[%s3 + $0x28] sm:$0xff] %vm54, %v1040
  %1081 = vst [vmem:[%s3 + $0x30] sm:$0xff] %v1041
  %1082 = vst.msk [vmem:[%s3 + $0x38] sm:$0xff] %vm54, %v1042
  %1083 = vst [vmem:[%s3 + $0x40] sm:$0xff] %v1043
  %1084 = vst.msk [vmem:[%s3 + $0x48] sm:$0xff] %vm54, %v1044
  %1085 = vst [vmem:[%s3 + $0x50] sm:$0xff] %v1045
  %1086 = vst.msk [vmem:[%s3 + $0x58] sm:$0xff] %vm54, %v1046
  %1087 = vst [vmem:[%s3 + $0x60] sm:$0xff] %v1047
  %1088 = vst.msk [vmem:[%s3 + $0x68] sm:$0xff] %vm54, %v1048
  %1089 = vst [vmem:[%s3 + $0x70] sm:$0xff] %v1049
  %1090 = vst.msk [vmem:[%s3 + $0x78] sm:$0xff] %vm54, %v1050
  %1091 = vst [vmem:[%s3 + $0x80] sm:$0xff] %v1051
  %1092 = vst.msk [vmem:[%s3 + $0x88] sm:$0xff] %vm54, %v1052
  %1093 = vst [vmem:[%s3 + $0x90] sm:$0xff] %v1053
  %1094 = vst.msk [vmem:[%s3 + $0x98] sm:$0xff] %vm54, %v1054
  %1095 = vst [vmem:[%s3 + $0xa0] sm:$0xff] %v1055
  %1096 = vst.msk [vmem:[%s3 + $0xa8] sm:$0xff] %vm54, %v1056
  %1097 = vst [vmem:[%s3 + $0xb0] sm:$0xff] %v1057
  %1098 = vst.msk [vmem:[%s3 + $0xb8] sm:$0xff] %vm54, %v1058
  %1099 = vst [vmem:[%s3 + $0xc0] sm:$0xff] %v1059
  %1100 = vst.msk [vmem:[%s3 + $0xc8] sm:$0xff] %vm54, %v1060
  %1101 = vst [vmem:[%s3 + $0xd0] sm:$0xff] %v1061
  %1102 = vst.msk [vmem:[%s3 + $0xd8] sm:$0xff] %vm54, %v1062
  %1103 = vst [vmem:[%s3 + $0xe0] sm:$0xff] %v1063
  %1104 = vst.msk [vmem:[%s3 + $0xe8] sm:$0xff] %vm54, %v1064
  %1105 = vst [vmem:[%s3 + $0xf0] sm:$0xff] %v1065
  %1106 = vst.msk [vmem:[%s3 + $0xf8] sm:$0xff] %vm54, %v1066
  %1107 = vst [vmem:[%s3 + $0x100] sm:$0xff] %v1067
  %1108 = vst.msk [vmem:[%s3 + $0x108] sm:$0xff] %vm54, %v1068
  %1109 = vst [vmem:[%s3 + $0x110] sm:$0xff] %v1069
  %1110 = vst.msk [vmem:[%s3 + $0x118] sm:$0xff] %vm54, %v1070
  %1111 = vst [vmem:[%s3 + $0x120] sm:$0xff] %v1071
  %1112 = vst.msk [vmem:[%s3 + $0x128] sm:$0xff] %vm54, %v1072
  %1113 = vst [vmem:[%s3 + $0x130] sm:$0xff] %v1073
  %1114 = vst.msk [vmem:[%s3 + $0x138] sm:$0xff] %vm54, %v1074
  // Predicated region
  $region14: #{batchnorm_add.1} parent=0 // pred_check
    _
  $region15: #{batchnorm_add.1} parent=0 // pred_check_branch
    %1116 = sbr.rel (0) target = $region17
  $region16: #{batchnorm_add.1} parent=0 // pred_region
    _
  $region17: #{batchnorm_add.1} parent=0 // pred_fallthru
    _
  // Predicated region
  $region18: #{batchnorm_add.1} parent=0 // pred_check
    _
  $region19: #{batchnorm_add.1} parent=0 // pred_check_branch
    %1118 = sbr.rel (0) target = $region21
  $region20: #{batchnorm_add.1} parent=0 // pred_region
    _
  $region21: #{batchnorm_add.1} parent=0 // pred_fallthru
    _

</llo_original>
